<compile_context>
chip_gen: v7x
topology: tpu7x:2x2x1
jax: 0.10.0
libtpu: 0.0.40
codegen_flags: <defaults>
</compile_context>

<pallas_src>
import functools

import jax
import jax.numpy as jnp
from jax.experimental import pallas as pl
from jax.experimental.pallas import tpu as pltpu

EPS = 1e-07
LANES = 128


def _tile_sum(x):
    """Full reduction of a 2-D tile -> (1, 1), staying 2-D throughout."""
    return jnp.sum(jnp.sum(x, axis=0, keepdims=True), axis=1, keepdims=True)


def _dice_kernel(logits_ref, labels_ref, out_ref, e_ref, *,
                 num_classes, hw, need_mask):
    # logits_ref: (1, C, rows, 128)  producer dtype (f32/bf16)
    # labels_ref: (1, rows, 128)     int32 (padded pixels hold label == C)
    # out_ref:    (1, 1, 8, 128)     f32  (row 0 = inter_c, row 1 = card_c)
    # e_ref:      (C, rows, 128)     f32  scratch: exp(x_c - m)
    rows = labels_ref.shape[1]
    lanes = labels_ref.shape[2]

    labels = labels_ref[0]                                    # (rows, lanes)

    # ---- pass 1: per-pixel max over classes (pure VPU, class = leading dim) --
    m = logits_ref[0, 0].astype(jnp.float32)
    for c in range(1, num_classes):
        m = jnp.maximum(m, logits_ref[0, c].astype(jnp.float32))

    # ---- pass 2: exponentials (one exp per element), stash + running sum ----
    s = None
    for c in range(num_classes):
        e = jnp.exp(logits_ref[0, c].astype(jnp.float32) - m)
        e_ref[c] = e
        s = e if s is None else s + e

    recip = pl.reciprocal(s, approx=False)                    # softmax denom
    if need_mask:
        # zero out the probabilities of padded (out-of-range) pixels
        t = pl.program_id(1)
        row_i = jax.lax.broadcasted_iota(jnp.int32, (rows, lanes), 0)
        lane_i = jax.lax.broadcasted_iota(jnp.int32, (rows, lanes), 1)
        pix = t * (rows * lanes) + row_i * lanes + lane_i
        recip = jnp.where(pix < hw, recip, 0.0)

    # ---- pass 3: per-class partial sums for this (batch, tile) block --------
    sub_i = jax.lax.broadcasted_iota(jnp.int32, (8, lanes), 0)
    lane8_i = jax.lax.broadcasted_iota(jnp.int32, (8, lanes), 1)
    out_tile = jnp.zeros((8, lanes), jnp.float32)
    for c in range(num_classes):
        prob_c = e_ref[c] * recip                             # (rows, lanes)
        onehot_c = (labels == c).astype(jnp.float32)          # pad label==C -> 0
        inter_c = _tile_sum(prob_c * onehot_c)                # (1, 1)
        card_c = _tile_sum(prob_c) + _tile_sum(onehot_c)      # (1, 1)
        out_tile = jnp.where((sub_i == 0) & (lane8_i == c), inter_c, out_tile)
        out_tile = jnp.where((sub_i == 1) & (lane8_i == c), card_c, out_tile)
    out_ref[0, 0] = out_tile


def _choose_tiling(rows_total, num_classes, itemsize):
    """Pick the spatial tile height (in 128-lane rows) and padded row count.

    Keeps one logits block around ~2 MiB so double-buffered inputs plus the exp
    scratch stay far inside the v7x scoped-VMEM budget (and v5e/v6e trivially).
    """
    cap = (2 * 1024 * 1024) // max(1, num_classes * LANES * itemsize)
    cap = max(8, min(512, cap))
    cap -= cap % 8
    if rows_total <= cap:
        return rows_total, rows_total          # single spatial tile, no padding
    cand = cap
    while cand >= max(8, cap // 2):            # prefer a clean divisor (no pad)
        if rows_total % cand == 0:
            return cand, rows_total
        cand -= 8
    rows = cap                                 # fall back: pad the row count
    rows_total_pad = -(-rows_total // rows) * rows
    return rows, rows_total_pad


def dice_loss(logits, true):
    """logits: (N, C, H, W) float (f32 or bf16), NCHW like PyTorch.
    true:   (N, 1, H, W) integer class labels in [0, C)."""
    N, C, H, W = logits.shape
    if C == 1:
        # TODO(synk): binary (C == 1) sigmoid branch not implemented.
        raise NotImplementedError("DiceLoss binary branch not implemented")
    HW = H * W
    rows_total = -(-HW // LANES)
    itemsize = jnp.dtype(logits.dtype).itemsize
    rows, rows_total_pad = _choose_tiling(rows_total, C, itemsize)
    num_tiles = rows_total_pad // rows
    hw_pad = rows_total_pad * LANES
    need_mask = hw_pad != HW

    logits_r = logits.reshape(N, C, HW)          # keep producer dtype (bf16 ok)
    labels_r = true.reshape(N, HW).astype(jnp.int32)
    if need_mask:
        logits_r = jnp.pad(logits_r, ((0, 0), (0, 0), (0, hw_pad - HW)))
        labels_r = jnp.pad(labels_r, ((0, 0), (0, hw_pad - HW)),
                           constant_values=C)
    logits_r = logits_r.reshape(N, C, rows_total_pad, LANES)
    labels_r = labels_r.reshape(N, rows_total_pad, LANES)

    kernel = functools.partial(_dice_kernel, num_classes=C, hw=HW,
                               need_mask=need_mask)

    partials = pl.pallas_call(
        kernel,
        out_shape=jax.ShapeDtypeStruct((N, num_tiles, 8, LANES), jnp.float32),
        grid_spec=pltpu.PrefetchScalarGridSpec(
            num_scalar_prefetch=0,
            grid=(N, num_tiles),
            in_specs=[
                pl.BlockSpec((1, C, rows, LANES), lambda b, t: (b, 0, t, 0)),
                pl.BlockSpec((1, rows, LANES), lambda b, t: (b, t, 0)),
            ],
            out_specs=pl.BlockSpec((1, 1, 8, LANES), lambda b, t: (b, t, 0, 0)),
            scratch_shapes=[pltpu.VMEM((C, rows, LANES), jnp.float32)],
        ),
        compiler_params=pltpu.CompilerParams(
            dimension_semantics=("parallel", "parallel"),
            vmem_limit_bytes=32 * 1024 * 1024,
        ),
        cost_estimate=pl.CostEstimate(
            flops=8 * N * C * hw_pad,
            transcendentals=N * C * hw_pad,
            bytes_accessed=(logits_r.size * itemsize + labels_r.size * 4
                            + N * num_tiles * 8 * LANES * 4),
        ),
    )(logits_r, labels_r)

    inter = jnp.sum(partials[:, :, 0, :C], axis=(0, 1))    # (C,)
    card = jnp.sum(partials[:, :, 1, :C], axis=(0, 1))     # (C,)
    dice = jnp.mean(2.0 * inter / (card + EPS))
    return 1.0 - dice


def dice_loss_ref(logits, true):
    """Pure-JAX reference mirroring the PyTorch multi-class branch."""
    C = logits.shape[1]
    labels = true[:, 0]                                      # (N, H, W)
    one_hot = jax.nn.one_hot(labels, C, dtype=jnp.float32)   # (N, H, W, C)
    one_hot = jnp.transpose(one_hot, (0, 3, 1, 2))           # (N, C, H, W)
    probas = jax.nn.softmax(logits.astype(jnp.float32), axis=1)
    dims = (0, 2, 3)
    intersection = jnp.sum(probas * one_hot, dims)
    cardinality = jnp.sum(probas + one_hot, dims)
    dice = jnp.mean(2.0 * intersection / (cardinality + EPS))
    return 1.0 - dice


if __name__ == "__main__":
    key = jax.random.PRNGKey(0)
    k1, k2 = jax.random.split(key)
    N, C, H, W = 2, 4, 16, 16
    logits = jax.random.normal(k1, (N, C, H, W), dtype=jnp.float32)
    true = jax.random.randint(k2, (N, 1, H, W), 0, C, dtype=jnp.int32)

    loss = jax.block_until_ready(dice_loss(logits, true))
    ref = jax.block_until_ready(dice_loss_ref(logits, true))

    assert jnp.allclose(loss, ref, atol=1e-5, rtol=1e-5), (loss, ref)
    print("KERNEL_OK")
</pallas_src>

<mosaic_0001>
module attributes {stable_mosaic.version = 11 : i64} {
  func.func @_dice_kernel(%arg0: i32, %arg1: i32, %arg2: memref<1x4x2x128xf32, #tpu.memory_space<vmem>>, %arg3: memref<1x2x128xi32, #tpu.memory_space<vmem>>, %arg4: memref<1x1x8x128xf32, #tpu.memory_space<vmem>>, %arg5: memref<4x2x128xf32, #tpu.memory_space<vmem>>) attributes {dimension_semantics = [#tpu.dimension_semantics<parallel>, #tpu.dimension_semantics<parallel>], iteration_bounds = array<i64: 2, 1>, scalar_prefetch = 0 : i64, scratch_operands = 1 : i64, tpu.core_type = #tpu.core_type<tc>, window_params = [{transform_indices = @transform_0, window_bounds = array<i64: 1, 4, 2, 128>}, {transform_indices = @transform_1, window_bounds = array<i64: 1, 2, 128>}, {transform_indices = @transform_2, window_bounds = array<i64: 1, 1, 8, 128>}]} {
    %c0 = arith.constant 0 : index
    %c0_0 = arith.constant 0 : index
    %c0_1 = arith.constant 0 : index
    %0 = vector.load %arg3[%c0, %c0_0, %c0_1] : memref<1x2x128xi32, #tpu.memory_space<vmem>>, vector<1x2x128xi32>
    %1 = vector.shape_cast %0 : vector<1x2x128xi32> to vector<2x128xi32>
    %c0_2 = arith.constant 0 : index
    %c0_3 = arith.constant 0 : index
    %c0_4 = arith.constant 0 : index
    %c0_5 = arith.constant 0 : index
    %2 = vector.load %arg2[%c0_2, %c0_3, %c0_4, %c0_5] : memref<1x4x2x128xf32, #tpu.memory_space<vmem>>, vector<1x1x2x128xf32>
    %3 = vector.shape_cast %2 : vector<1x1x2x128xf32> to vector<2x128xf32>
    %c0_6 = arith.constant 0 : index
    %c1 = arith.constant 1 : index
    %c0_7 = arith.constant 0 : index
    %c0_8 = arith.constant 0 : index
    %4 = vector.load %arg2[%c0_6, %c1, %c0_7, %c0_8] : memref<1x4x2x128xf32, #tpu.memory_space<vmem>>, vector<1x1x2x128xf32>
    %5 = vector.shape_cast %4 : vector<1x1x2x128xf32> to vector<2x128xf32>
    %6 = arith.maximumf %3, %5 : vector<2x128xf32>
    %c0_9 = arith.constant 0 : index
    %c2 = arith.constant 2 : index
    %c0_10 = arith.constant 0 : index
    %c0_11 = arith.constant 0 : index
    %7 = vector.load %arg2[%c0_9, %c2, %c0_10, %c0_11] : memref<1x4x2x128xf32, #tpu.memory_space<vmem>>, vector<1x1x2x128xf32>
    %8 = vector.shape_cast %7 : vector<1x1x2x128xf32> to vector<2x128xf32>
    %9 = arith.maximumf %6, %8 : vector<2x128xf32>
    %c0_12 = arith.constant 0 : index
    %c3 = arith.constant 3 : index
    %c0_13 = arith.constant 0 : index
    %c0_14 = arith.constant 0 : index
    %10 = vector.load %arg2[%c0_12, %c3, %c0_13, %c0_14] : memref<1x4x2x128xf32, #tpu.memory_space<vmem>>, vector<1x1x2x128xf32>
    %11 = vector.shape_cast %10 : vector<1x1x2x128xf32> to vector<2x128xf32>
    %12 = arith.maximumf %9, %11 : vector<2x128xf32>
    %c0_15 = arith.constant 0 : index
    %c0_16 = arith.constant 0 : index
    %c0_17 = arith.constant 0 : index
    %c0_18 = arith.constant 0 : index
    %13 = vector.load %arg2[%c0_15, %c0_16, %c0_17, %c0_18] : memref<1x4x2x128xf32, #tpu.memory_space<vmem>>, vector<1x1x2x128xf32>
    %14 = vector.shape_cast %13 : vector<1x1x2x128xf32> to vector<2x128xf32>
    %15 = arith.subf %14, %12 : vector<2x128xf32>
    %16 = math.exp %15 : vector<2x128xf32>
    %c0_19 = arith.constant 0 : index
    %c0_20 = arith.constant 0 : index
    %c0_21 = arith.constant 0 : index
    %17 = vector.load %arg5[%c0_19, %c0_20, %c0_21] : memref<4x2x128xf32, #tpu.memory_space<vmem>>, vector<1x2x128xf32>
    %18 = vector.shape_cast %17 : vector<1x2x128xf32> to vector<2x128xf32>
    %19 = vector.shape_cast %16 : vector<2x128xf32> to vector<1x2x128xf32>
    tpu.vector_store %arg5[%c0_19, %c0_20, %c0_21], %19 {strides = array<i32>} : memref<4x2x128xf32, #tpu.memory_space<vmem>>, vector<1x2x128xf32>,
    %c0_22 = arith.constant 0 : index
    %c1_23 = arith.constant 1 : index
    %c0_24 = arith.constant 0 : index
    %c0_25 = arith.constant 0 : index
    %20 = vector.load %arg2[%c0_22, %c1_23, %c0_24, %c0_25] : memref<1x4x2x128xf32, #tpu.memory_space<vmem>>, vector<1x1x2x128xf32>
    %21 = vector.shape_cast %20 : vector<1x1x2x128xf32> to vector<2x128xf32>
    %22 = arith.subf %21, %12 : vector<2x128xf32>
    %23 = math.exp %22 : vector<2x128xf32>
    %c1_26 = arith.constant 1 : index
    %c0_27 = arith.constant 0 : index
    %c0_28 = arith.constant 0 : index
    %24 = vector.load %arg5[%c1_26, %c0_27, %c0_28] : memref<4x2x128xf32, #tpu.memory_space<vmem>>, vector<1x2x128xf32>
    %25 = vector.shape_cast %24 : vector<1x2x128xf32> to vector<2x128xf32>
    %26 = vector.shape_cast %23 : vector<2x128xf32> to vector<1x2x128xf32>
    tpu.vector_store %arg5[%c1_26, %c0_27, %c0_28], %26 {strides = array<i32>} : memref<4x2x128xf32, #tpu.memory_space<vmem>>, vector<1x2x128xf32>,
    %27 = arith.addf %16, %23 : vector<2x128xf32>
    %c0_29 = arith.constant 0 : index
    %c2_30 = arith.constant 2 : index
    %c0_31 = arith.constant 0 : index
    %c0_32 = arith.constant 0 : index
    %28 = vector.load %arg2[%c0_29, %c2_30, %c0_31, %c0_32] : memref<1x4x2x128xf32, #tpu.memory_space<vmem>>, vector<1x1x2x128xf32>
    %29 = vector.shape_cast %28 : vector<1x1x2x128xf32> to vector<2x128xf32>
    %30 = arith.subf %29, %12 : vector<2x128xf32>
    %31 = math.exp %30 : vector<2x128xf32>
    %c2_33 = arith.constant 2 : index
    %c0_34 = arith.constant 0 : index
    %c0_35 = arith.constant 0 : index
    %32 = vector.load %arg5[%c2_33, %c0_34, %c0_35] : memref<4x2x128xf32, #tpu.memory_space<vmem>>, vector<1x2x128xf32>
    %33 = vector.shape_cast %32 : vector<1x2x128xf32> to vector<2x128xf32>
    %34 = vector.shape_cast %31 : vector<2x128xf32> to vector<1x2x128xf32>
    tpu.vector_store %arg5[%c2_33, %c0_34, %c0_35], %34 {strides = array<i32>} : memref<4x2x128xf32, #tpu.memory_space<vmem>>, vector<1x2x128xf32>,
    %35 = arith.addf %27, %31 : vector<2x128xf32>
    %c0_36 = arith.constant 0 : index
    %c3_37 = arith.constant 3 : index
    %c0_38 = arith.constant 0 : index
    %c0_39 = arith.constant 0 : index
    %36 = vector.load %arg2[%c0_36, %c3_37, %c0_38, %c0_39] : memref<1x4x2x128xf32, #tpu.memory_space<vmem>>, vector<1x1x2x128xf32>
    %37 = vector.shape_cast %36 : vector<1x1x2x128xf32> to vector<2x128xf32>
    %38 = arith.subf %37, %12 : vector<2x128xf32>
    %39 = math.exp %38 : vector<2x128xf32>
    %c3_40 = arith.constant 3 : index
    %c0_41 = arith.constant 0 : index
    %c0_42 = arith.constant 0 : index
    %40 = vector.load %arg5[%c3_40, %c0_41, %c0_42] : memref<4x2x128xf32, #tpu.memory_space<vmem>>, vector<1x2x128xf32>
    %41 = vector.shape_cast %40 : vector<1x2x128xf32> to vector<2x128xf32>
    %42 = vector.shape_cast %39 : vector<2x128xf32> to vector<1x2x128xf32>
    tpu.vector_store %arg5[%c3_40, %c0_41, %c0_42], %42 {strides = array<i32>} : memref<4x2x128xf32, #tpu.memory_space<vmem>>, vector<1x2x128xf32>,
    %43 = arith.addf %35, %39 : vector<2x128xf32>
    %44 = tpu.reciprocal %43 : vector<2x128xf32> -> vector<2x128xf32>
    %45 = tpu.iota {dimensions = array<i32: 0>} : vector<8x128xi32>
    %46 = tpu.iota {dimensions = array<i32: 1>} : vector<8x128xi32>
    %cst = arith.constant 0.000000e+00 : f32
    %47 = vector.broadcast %cst : f32 to vector<8x128xf32>
    %c0_43 = arith.constant 0 : index
    %c0_44 = arith.constant 0 : index
    %c0_45 = arith.constant 0 : index
    %48 = vector.load %arg5[%c0_43, %c0_44, %c0_45] : memref<4x2x128xf32, #tpu.memory_space<vmem>>, vector<1x2x128xf32>
    %49 = vector.shape_cast %48 : vector<1x2x128xf32> to vector<2x128xf32>
    %50 = arith.mulf %49, %44 : vector<2x128xf32>
    %c0_i32 = arith.constant 0 : i32
    %51 = vector.broadcast %c0_i32 : i32 to vector<2x128xi32>
    %52 = arith.cmpi eq, %1, %51 : vector<2x128xi32>
    %53 = arith.extui %52 : vector<2x128xi1> to vector<2x128xi32>
    %54 = arith.sitofp %53 : vector<2x128xi32> to vector<2x128xf32>
    %55 = arith.mulf %50, %54 : vector<2x128xf32>
    %cst_46 = arith.constant dense<0.000000e+00> : vector<128xf32>
    %56 = vector.multi_reduction <add>, %55, %cst_46 [0] : vector<2x128xf32> to vector<128xf32>
    %57 = vector.shape_cast %56 : vector<128xf32> to vector<1x128xf32>
    %cst_47 = arith.constant dense<0.000000e+00> : vector<1xf32>
    %58 = vector.multi_reduction <add>, %57, %cst_47 [1] : vector<1x128xf32> to vector<1xf32>
    %59 = vector.shape_cast %58 : vector<1xf32> to vector<1x1xf32>
    %cst_48 = arith.constant dense<0.000000e+00> : vector<128xf32>
    %60 = vector.multi_reduction <add>, %50, %cst_48 [0] : vector<2x128xf32> to vector<128xf32>
    %61 = vector.shape_cast %60 : vector<128xf32> to vector<1x128xf32>
    %cst_49 = arith.constant dense<0.000000e+00> : vector<1xf32>
    %62 = vector.multi_reduction <add>, %61, %cst_49 [1] : vector<1x128xf32> to vector<1xf32>
    %63 = vector.shape_cast %62 : vector<1xf32> to vector<1x1xf32>
    %cst_50 = arith.constant dense<0.000000e+00> : vector<128xf32>
    %64 = vector.multi_reduction <add>, %54, %cst_50 [0] : vector<2x128xf32> to vector<128xf32>
    %65 = vector.shape_cast %64 : vector<128xf32> to vector<1x128xf32>
    %cst_51 = arith.constant dense<0.000000e+00> : vector<1xf32>
    %66 = vector.multi_reduction <add>, %65, %cst_51 [1] : vector<1x128xf32> to vector<1xf32>
    %67 = vector.shape_cast %66 : vector<1xf32> to vector<1x1xf32>
    %68 = arith.addf %63, %67 : vector<1x1xf32>
    %c0_i32_52 = arith.constant 0 : i32
    %69 = vector.broadcast %c0_i32_52 : i32 to vector<8x128xi32>
    %70 = arith.cmpi eq, %45, %69 : vector<8x128xi32>
    %c0_i32_53 = arith.constant 0 : i32
    %71 = vector.broadcast %c0_i32_53 : i32 to vector<8x128xi32>
    %72 = arith.cmpi eq, %46, %71 : vector<8x128xi32>
    %73 = arith.andi %70, %72 : vector<8x128xi1>
    %74 = vector.shape_cast %59 : vector<1x1xf32> to vector<1x1xf32>
    %75 = vector.broadcast %74 : vector<1x1xf32> to vector<8x128xf32>
    %76 = arith.select %73, %75, %47 : vector<8x128xi1>, vector<8x128xf32>
    %c1_i32 = arith.constant 1 : i32
    %77 = vector.broadcast %c1_i32 : i32 to vector<8x128xi32>
    %78 = arith.cmpi eq, %45, %77 : vector<8x128xi32>
    %c0_i32_54 = arith.constant 0 : i32
    %79 = vector.broadcast %c0_i32_54 : i32 to vector<8x128xi32>
    %80 = arith.cmpi eq, %46, %79 : vector<8x128xi32>
    %81 = arith.andi %78, %80 : vector<8x128xi1>
    %82 = vector.shape_cast %68 : vector<1x1xf32> to vector<1x1xf32>
    %83 = vector.broadcast %82 : vector<1x1xf32> to vector<8x128xf32>
    %84 = arith.select %81, %83, %76 : vector<8x128xi1>, vector<8x128xf32>
    %c1_55 = arith.constant 1 : index
    %c0_56 = arith.constant 0 : index
    %c0_57 = arith.constant 0 : index
    %85 = vector.load %arg5[%c1_55, %c0_56, %c0_57] : memref<4x2x128xf32, #tpu.memory_space<vmem>>, vector<1x2x128xf32>
    %86 = vector.shape_cast %85 : vector<1x2x128xf32> to vector<2x128xf32>
    %87 = arith.mulf %86, %44 : vector<2x128xf32>
    %c1_i32_58 = arith.constant 1 : i32
    %88 = vector.broadcast %c1_i32_58 : i32 to vector<2x128xi32>
    %89 = arith.cmpi eq, %1, %88 : vector<2x128xi32>
    %90 = arith.extui %89 : vector<2x128xi1> to vector<2x128xi32>
    %91 = arith.sitofp %90 : vector<2x128xi32> to vector<2x128xf32>
    %92 = arith.mulf %87, %91 : vector<2x128xf32>
    %cst_59 = arith.constant dense<0.000000e+00> : vector<128xf32>
    %93 = vector.multi_reduction <add>, %92, %cst_59 [0] : vector<2x128xf32> to vector<128xf32>
    %94 = vector.shape_cast %93 : vector<128xf32> to vector<1x128xf32>
    %cst_60 = arith.constant dense<0.000000e+00> : vector<1xf32>
    %95 = vector.multi_reduction <add>, %94, %cst_60 [1] : vector<1x128xf32> to vector<1xf32>
    %96 = vector.shape_cast %95 : vector<1xf32> to vector<1x1xf32>
    %cst_61 = arith.constant dense<0.000000e+00> : vector<128xf32>
    %97 = vector.multi_reduction <add>, %87, %cst_61 [0] : vector<2x128xf32> to vector<128xf32>
    %98 = vector.shape_cast %97 : vector<128xf32> to vector<1x128xf32>
    %cst_62 = arith.constant dense<0.000000e+00> : vector<1xf32>
    %99 = vector.multi_reduction <add>, %98, %cst_62 [1] : vector<1x128xf32> to vector<1xf32>
    %100 = vector.shape_cast %99 : vector<1xf32> to vector<1x1xf32>
    %cst_63 = arith.constant dense<0.000000e+00> : vector<128xf32>
    %101 = vector.multi_reduction <add>, %91, %cst_63 [0] : vector<2x128xf32> to vector<128xf32>
    %102 = vector.shape_cast %101 : vector<128xf32> to vector<1x128xf32>
    %cst_64 = arith.constant dense<0.000000e+00> : vector<1xf32>
    %103 = vector.multi_reduction <add>, %102, %cst_64 [1] : vector<1x128xf32> to vector<1xf32>
    %104 = vector.shape_cast %103 : vector<1xf32> to vector<1x1xf32>
    %105 = arith.addf %100, %104 : vector<1x1xf32>
    %c0_i32_65 = arith.constant 0 : i32
    %106 = vector.broadcast %c0_i32_65 : i32 to vector<8x128xi32>
    %107 = arith.cmpi eq, %45, %106 : vector<8x128xi32>
    %c1_i32_66 = arith.constant 1 : i32
    %108 = vector.broadcast %c1_i32_66 : i32 to vector<8x128xi32>
    %109 = arith.cmpi eq, %46, %108 : vector<8x128xi32>
    %110 = arith.andi %107, %109 : vector<8x128xi1>
    %111 = vector.shape_cast %96 : vector<1x1xf32> to vector<1x1xf32>
    %112 = vector.broadcast %111 : vector<1x1xf32> to vector<8x128xf32>
    %113 = arith.select %110, %112, %84 : vector<8x128xi1>, vector<8x128xf32>
    %c1_i32_67 = arith.constant 1 : i32
    %114 = vector.broadcast %c1_i32_67 : i32 to vector<8x128xi32>
    %115 = arith.cmpi eq, %45, %114 : vector<8x128xi32>
    %c1_i32_68 = arith.constant 1 : i32
    %116 = vector.broadcast %c1_i32_68 : i32 to vector<8x128xi32>
    %117 = arith.cmpi eq, %46, %116 : vector<8x128xi32>
    %118 = arith.andi %115, %117 : vector<8x128xi1>
    %119 = vector.shape_cast %105 : vector<1x1xf32> to vector<1x1xf32>
    %120 = vector.broadcast %119 : vector<1x1xf32> to vector<8x128xf32>
    %121 = arith.select %118, %120, %113 : vector<8x128xi1>, vector<8x128xf32>
    %c2_69 = arith.constant 2 : index
    %c0_70 = arith.constant 0 : index
    %c0_71 = arith.constant 0 : index
    %122 = vector.load %arg5[%c2_69, %c0_70, %c0_71] : memref<4x2x128xf32, #tpu.memory_space<vmem>>, vector<1x2x128xf32>
    %123 = vector.shape_cast %122 : vector<1x2x128xf32> to vector<2x128xf32>
    %124 = arith.mulf %123, %44 : vector<2x128xf32>
    %c2_i32 = arith.constant 2 : i32
    %125 = vector.broadcast %c2_i32 : i32 to vector<2x128xi32>
    %126 = arith.cmpi eq, %1, %125 : vector<2x128xi32>
    %127 = arith.extui %126 : vector<2x128xi1> to vector<2x128xi32>
    %128 = arith.sitofp %127 : vector<2x128xi32> to vector<2x128xf32>
    %129 = arith.mulf %124, %128 : vector<2x128xf32>
    %cst_72 = arith.constant dense<0.000000e+00> : vector<128xf32>
    %130 = vector.multi_reduction <add>, %129, %cst_72 [0] : vector<2x128xf32> to vector<128xf32>
    %131 = vector.shape_cast %130 : vector<128xf32> to vector<1x128xf32>
    %cst_73 = arith.constant dense<0.000000e+00> : vector<1xf32>
    %132 = vector.multi_reduction <add>, %131, %cst_73 [1] : vector<1x128xf32> to vector<1xf32>
    %133 = vector.shape_cast %132 : vector<1xf32> to vector<1x1xf32>
    %cst_74 = arith.constant dense<0.000000e+00> : vector<128xf32>
    %134 = vector.multi_reduction <add>, %124, %cst_74 [0] : vector<2x128xf32> to vector<128xf32>
    %135 = vector.shape_cast %134 : vector<128xf32> to vector<1x128xf32>
    %cst_75 = arith.constant dense<0.000000e+00> : vector<1xf32>
    %136 = vector.multi_reduction <add>, %135, %cst_75 [1] : vector<1x128xf32> to vector<1xf32>
    %137 = vector.shape_cast %136 : vector<1xf32> to vector<1x1xf32>
    %cst_76 = arith.constant dense<0.000000e+00> : vector<128xf32>
    %138 = vector.multi_reduction <add>, %128, %cst_76 [0] : vector<2x128xf32> to vector<128xf32>
    %139 = vector.shape_cast %138 : vector<128xf32> to vector<1x128xf32>
    %cst_77 = arith.constant dense<0.000000e+00> : vector<1xf32>
    %140 = vector.multi_reduction <add>, %139, %cst_77 [1] : vector<1x128xf32> to vector<1xf32>
    %141 = vector.shape_cast %140 : vector<1xf32> to vector<1x1xf32>
    %142 = arith.addf %137, %141 : vector<1x1xf32>
    %c0_i32_78 = arith.constant 0 : i32
    %143 = vector.broadcast %c0_i32_78 : i32 to vector<8x128xi32>
    %144 = arith.cmpi eq, %45, %143 : vector<8x128xi32>
    %c2_i32_79 = arith.constant 2 : i32
    %145 = vector.broadcast %c2_i32_79 : i32 to vector<8x128xi32>
    %146 = arith.cmpi eq, %46, %145 : vector<8x128xi32>
    %147 = arith.andi %144, %146 : vector<8x128xi1>
    %148 = vector.shape_cast %133 : vector<1x1xf32> to vector<1x1xf32>
    %149 = vector.broadcast %148 : vector<1x1xf32> to vector<8x128xf32>
    %150 = arith.select %147, %149, %121 : vector<8x128xi1>, vector<8x128xf32>
    %c1_i32_80 = arith.constant 1 : i32
    %151 = vector.broadcast %c1_i32_80 : i32 to vector<8x128xi32>
    %152 = arith.cmpi eq, %45, %151 : vector<8x128xi32>
    %c2_i32_81 = arith.constant 2 : i32
    %153 = vector.broadcast %c2_i32_81 : i32 to vector<8x128xi32>
    %154 = arith.cmpi eq, %46, %153 : vector<8x128xi32>
    %155 = arith.andi %152, %154 : vector<8x128xi1>
    %156 = vector.shape_cast %142 : vector<1x1xf32> to vector<1x1xf32>
    %157 = vector.broadcast %156 : vector<1x1xf32> to vector<8x128xf32>
    %158 = arith.select %155, %157, %150 : vector<8x128xi1>, vector<8x128xf32>
    %c3_82 = arith.constant 3 : index
    %c0_83 = arith.constant 0 : index
    %c0_84 = arith.constant 0 : index
    %159 = vector.load %arg5[%c3_82, %c0_83, %c0_84] : memref<4x2x128xf32, #tpu.memory_space<vmem>>, vector<1x2x128xf32>
    %160 = vector.shape_cast %159 : vector<1x2x128xf32> to vector<2x128xf32>
    %161 = arith.mulf %160, %44 : vector<2x128xf32>
    %c3_i32 = arith.constant 3 : i32
    %162 = vector.broadcast %c3_i32 : i32 to vector<2x128xi32>
    %163 = arith.cmpi eq, %1, %162 : vector<2x128xi32>
    %164 = arith.extui %163 : vector<2x128xi1> to vector<2x128xi32>
    %165 = arith.sitofp %164 : vector<2x128xi32> to vector<2x128xf32>
    %166 = arith.mulf %161, %165 : vector<2x128xf32>
    %cst_85 = arith.constant dense<0.000000e+00> : vector<128xf32>
    %167 = vector.multi_reduction <add>, %166, %cst_85 [0] : vector<2x128xf32> to vector<128xf32>
    %168 = vector.shape_cast %167 : vector<128xf32> to vector<1x128xf32>
    %cst_86 = arith.constant dense<0.000000e+00> : vector<1xf32>
    %169 = vector.multi_reduction <add>, %168, %cst_86 [1] : vector<1x128xf32> to vector<1xf32>
    %170 = vector.shape_cast %169 : vector<1xf32> to vector<1x1xf32>
    %cst_87 = arith.constant dense<0.000000e+00> : vector<128xf32>
    %171 = vector.multi_reduction <add>, %161, %cst_87 [0] : vector<2x128xf32> to vector<128xf32>
    %172 = vector.shape_cast %171 : vector<128xf32> to vector<1x128xf32>
    %cst_88 = arith.constant dense<0.000000e+00> : vector<1xf32>
    %173 = vector.multi_reduction <add>, %172, %cst_88 [1] : vector<1x128xf32> to vector<1xf32>
    %174 = vector.shape_cast %173 : vector<1xf32> to vector<1x1xf32>
    %cst_89 = arith.constant dense<0.000000e+00> : vector<128xf32>
    %175 = vector.multi_reduction <add>, %165, %cst_89 [0] : vector<2x128xf32> to vector<128xf32>
    %176 = vector.shape_cast %175 : vector<128xf32> to vector<1x128xf32>
    %cst_90 = arith.constant dense<0.000000e+00> : vector<1xf32>
    %177 = vector.multi_reduction <add>, %176, %cst_90 [1] : vector<1x128xf32> to vector<1xf32>
    %178 = vector.shape_cast %177 : vector<1xf32> to vector<1x1xf32>
    %179 = arith.addf %174, %178 : vector<1x1xf32>
    %c0_i32_91 = arith.constant 0 : i32
    %180 = vector.broadcast %c0_i32_91 : i32 to vector<8x128xi32>
    %181 = arith.cmpi eq, %45, %180 : vector<8x128xi32>
    %c3_i32_92 = arith.constant 3 : i32
    %182 = vector.broadcast %c3_i32_92 : i32 to vector<8x128xi32>
    %183 = arith.cmpi eq, %46, %182 : vector<8x128xi32>
    %184 = arith.andi %181, %183 : vector<8x128xi1>
    %185 = vector.shape_cast %170 : vector<1x1xf32> to vector<1x1xf32>
    %186 = vector.broadcast %185 : vector<1x1xf32> to vector<8x128xf32>
    %187 = arith.select %184, %186, %158 : vector<8x128xi1>, vector<8x128xf32>
    %c1_i32_93 = arith.constant 1 : i32
    %188 = vector.broadcast %c1_i32_93 : i32 to vector<8x128xi32>
    %189 = arith.cmpi eq, %45, %188 : vector<8x128xi32>
    %c3_i32_94 = arith.constant 3 : i32
    %190 = vector.broadcast %c3_i32_94 : i32 to vector<8x128xi32>
    %191 = arith.cmpi eq, %46, %190 : vector<8x128xi32>
    %192 = arith.andi %189, %191 : vector<8x128xi1>
    %193 = vector.shape_cast %179 : vector<1x1xf32> to vector<1x1xf32>
    %194 = vector.broadcast %193 : vector<1x1xf32> to vector<8x128xf32>
    %195 = arith.select %192, %194, %187 : vector<8x128xi1>, vector<8x128xf32>
    %c0_95 = arith.constant 0 : index
    %c0_96 = arith.constant 0 : index
    %c0_97 = arith.constant 0 : index
    %c0_98 = arith.constant 0 : index
    %196 = vector.load %arg4[%c0_95, %c0_96, %c0_97, %c0_98] : memref<1x1x8x128xf32, #tpu.memory_space<vmem>>, vector<1x1x8x128xf32>
    %197 = vector.shape_cast %196 : vector<1x1x8x128xf32> to vector<8x128xf32>
    %198 = vector.shape_cast %195 : vector<8x128xf32> to vector<1x1x8x128xf32>
    tpu.vector_store %arg4[%c0_95, %c0_96, %c0_97, %c0_98], %198 {strides = array<i32>} : memref<1x1x8x128xf32, #tpu.memory_space<vmem>>, vector<1x1x8x128xf32>,
    return
  }
  func.func @transform_0(%arg0: i32, %arg1: i32) -> (i32, i32, i32, i32) {
    %c0_i32 = arith.constant 0 : i32
    %c0_i32_0 = arith.constant 0 : i32
    %c0_i32_1 = arith.constant 0 : i32
    return %arg0, %c0_i32, %arg1, %c0_i32_0 : i32, i32, i32, i32
  }
  func.func @transform_1(%arg0: i32, %arg1: i32) -> (i32, i32, i32) {
    %c0_i32 = arith.constant 0 : i32
    %c0_i32_0 = arith.constant 0 : i32
    return %arg0, %arg1, %c0_i32 : i32, i32, i32
  }
  func.func @transform_2(%arg0: i32, %arg1: i32) -> (i32, i32, i32, i32) {
    %c0_i32 = arith.constant 0 : i32
    %c0_i32_0 = arith.constant 0 : i32
    %c0_i32_1 = arith.constant 0 : i32
    return %arg0, %arg1, %c0_i32, %c0_i32_0 : i32, i32, i32, i32
  }
}

</mosaic_0001>

<llo_original>
// kernel: tpu_custom_call.1
$region0: #{tpu_custom_call.1}
  #allocation0 [shape = 'u32[]', space=smem, size = 0x4, offset = 0x4, fixed_abs, tag = 'smem constant byte address 0x4 - core index']
  #allocation1 [shape = 'u32[144,128]{1,0:T(1,128)}', space=vmem, size = 0x12000, scoped, tag = 'internal scratch']
  #allocation2 [shape = 'f32[4,2,128]{2,1,0:T(2,128)}', space=vmem, size = 0x1000, scoped, tag = 'scratch operand']
  %s0 = inlined_call_operand.hbm [shape: f32[2,4,2,128], index: 0, kind: input, shape index: {}]
  %s1 = inlined_call_operand.hbm [shape: s32[2,2,128], index: 1, kind: input, shape index: {}]
  %s2 = inlined_call_operand.hbm [shape: f32[2,1,8,128], index: 2, kind: output, shape index: {}]
  %s3 = sld [smem:[#allocation0]]
  $region49: #{tpu_custom_call.1} parent=0
    _
  %s5 = ssub.s32 1, %s3
  %s6 = scalar_select 0, %s5, %s3
  $region1: #{tpu_custom_call.1} parent=0
    #allocation3 [shape = 'u8[8192]{0}', space=vmem, size = 0x2000, scoped, tag = 'input window, operand 0']
    #allocation4 [shape = 's32[2]{0}', space=sflag, size = 0x8, scoped, tag = 'scoped memory for tpu_custom_call.1']
    #allocation5 [shape = 's32[2]{0}', space=sflag, size = 0x8, scoped, tag = 'scoped memory for tpu_custom_call.1']
    #allocation6 [shape = 'u8[2048]{0}', space=vmem, size = 0x800, scoped, tag = 'input window, operand 1']
    #allocation7 [shape = 's32[2]{0}', space=sflag, size = 0x8, scoped, tag = 'scoped memory for tpu_custom_call.1']
    #allocation8 [shape = 'u8[8192]{0}', space=vmem, size = 0x2000, scoped, tag = 'output window, operand 0']
    %7 = vsyncpa [#allocation4], 0
    %s8 = scalar_lea.sflag [#allocation4], 1
    %9 = vsyncpa %s8, 0
    %10 = vsyncpa [#allocation7], 0
    %s11 = scalar_lea.sflag [#allocation7], 1
    %12 = vsyncpa %s11, 0
    %13 = vsyncpa [#allocation5], 0
    %s14 = scalar_lea.sflag [#allocation5], 1
    %15 = vsyncpa %s14, 0
    loop: start=0, step=1, limit=4
    $region2: #{tpu_custom_call.1} parent=1 // loop_pre_header
      _
    $region3: #{tpu_custom_call.1} parent=1 // loop_header
      %s17 = sphi 0, %s21
      %p18 = scmp.ge.s32.totalorder %s17, 4
      %s24 = sphi 0, %s36
      %s25 = sphi 0, %s32
      %s26 = sphi 0, %s24
      %s27 = sphi 0, %s25
      %s28 = sphi 0, %s26
      %s29 = sphi 0, %s27
      %s41 = sphi 0, %s43
      %s44 = sphi 0, %s41
      %s45 = sphi 0, %s44
      %s61 = sphi 0, %s45
      %s69 = sphi 0, %s71
      %s72 = sphi 0, %s69
      %s73 = sphi 0, %s72
      %s89 = sphi 0, %s73
      %s97 = sphi 0, %s99
      %s100 = sphi 0, %s97
      %s101 = sphi 0, %s100
      %s117 = sphi 0, %s101
    $region4: #{tpu_custom_call.1} parent=1 // loop_header_branch
      %20 = sbr.rel (%p18) target = $region8
    $region5: #{tpu_custom_call.1} parent=1 // loop_body
      %s22 = ssub.s32 %s17, 1
      %s23 = ssub.s32 %s17, 2
      %s30 = sadd.s32 1, %s25
      %p31 = scmp.ge.s32.totalorder %s30, 1
      %s32 = scalar_select %p31, 0, %s30
      %s33 = sadd.s32 1, %s24
      %s34 = scalar_select %p31, %s33, %s24
      %p35 = scmp.ge.s32.totalorder %s34, 2
      %s36 = scalar_select %p35, 0, %s34
      %s37 = ssub.s32 %s24, %s36
      %s38 = ssub.s32 %s25, %s32
      %s39 = sor.u32 %s37, %s38
      %p40 = scmp.eq.s32.totalorder %s39, 0
      %s42 = sadd.s32 %s41, 1
      %s43 = scalar_select %p40, %s41, %s42
      %p46 = pneg %p40
      %p47 = scmp.eq.s32.totalorder %s17, 1
      %p48 = por %p46, %p47
      %p49 = scmp.ne.s32.totalorder %s41, %s44
      %p50 = scmp.eq.s32.totalorder %s17, 0
      %p51 = por %p49, %p50
      %p52 = scmp.ne.s32.totalorder %s41, %s44
      %p53 = scmp.eq.s32.totalorder %s22, 1
      %p54 = por %p52, %p53
      %p55 = scmp.ne.s32.totalorder %s44, %s45
      %p56 = scmp.eq.s32.totalorder %s22, 0
      %p57 = por %p55, %p56
      %p58 = scmp.ne.s32.totalorder %s44, %s45
      %p59 = scmp.eq.s32.totalorder %s23, 1
      %p60 = por %p58, %p59
      %p62 = scmp.ne.s32.totalorder %s45, %s61
      %p63 = scmp.eq.s32.totalorder %s23, 0
      %p64 = por %p62, %p63
      %s65 = ssub.s32 %s24, %s36
      %s66 = ssub.s32 %s25, %s32
      %s67 = sor.u32 %s65, %s66
      %p68 = scmp.eq.s32.totalorder %s67, 0
      %s70 = sadd.s32 %s69, 1
      %s71 = scalar_select %p68, %s69, %s70
      %p74 = pneg %p68
      %p75 = scmp.eq.s32.totalorder %s17, 1
      %p76 = por %p74, %p75
      %p77 = scmp.ne.s32.totalorder %s69, %s72
      %p78 = scmp.eq.s32.totalorder %s17, 0
      %p79 = por %p77, %p78
      %p80 = scmp.ne.s32.totalorder %s69, %s72
      %p81 = scmp.eq.s32.totalorder %s22, 1
      %p82 = por %p80, %p81
      %p83 = scmp.ne.s32.totalorder %s72, %s73
      %p84 = scmp.eq.s32.totalorder %s22, 0
      %p85 = por %p83, %p84
      %p86 = scmp.ne.s32.totalorder %s72, %s73
      %p87 = scmp.eq.s32.totalorder %s23, 1
      %p88 = por %p86, %p87
      %p90 = scmp.ne.s32.totalorder %s73, %s89
      %p91 = scmp.eq.s32.totalorder %s23, 0
      %p92 = por %p90, %p91
      %s93 = ssub.s32 %s24, %s36
      %s94 = ssub.s32 %s25, %s32
      %s95 = sor.u32 %s93, %s94
      %p96 = scmp.eq.s32.totalorder %s95, 0
      %s98 = sadd.s32 %s97, 1
      %s99 = scalar_select %p96, %s97, %s98
      %p102 = pneg %p96
      %p103 = scmp.eq.s32.totalorder %s17, 1
      %p104 = por %p102, %p103
      %p105 = scmp.ne.s32.totalorder %s97, %s100
      %p106 = scmp.eq.s32.totalorder %s17, 0
      %p107 = por %p105, %p106
      %p108 = scmp.ne.s32.totalorder %s97, %s100
      %p109 = scmp.eq.s32.totalorder %s22, 1
      %p110 = por %p108, %p109
      %p111 = scmp.ne.s32.totalorder %s100, %s101
      %p112 = scmp.eq.s32.totalorder %s22, 0
      %p113 = por %p111, %p112
      %p114 = scmp.ne.s32.totalorder %s100, %s101
      %p115 = scmp.eq.s32.totalorder %s23, 1
      %p116 = por %p114, %p115
      %p118 = scmp.ne.s32.totalorder %s101, %s117
      %p119 = scmp.eq.s32.totalorder %s23, 0
      %p120 = por %p118, %p119
      %p121 = scmp.le.s32.totalorder 1, %s17
      %p122 = scmp.lt.s32.totalorder %s17, 3
      %p123 = pnand %p121, %p122
      %p124 = pneg %p123
      // Predicated region
      $region9: #{tpu_custom_call.1} parent=5 // pred_check
        _
      $region10: #{tpu_custom_call.1} parent=5 // pred_check_branch
        %126 = sbr.rel (%p123) target = $region12
      $region11: #{tpu_custom_call.1} parent=5 // pred_region
        %s127 = ssub.s32 %s17, 1
      $region12: #{tpu_custom_call.1} parent=5 // pred_fallthru
        _
      %p128 = scmp.lt.s32.totalorder %s17, 2
      // Predicated region
      $region13: #{tpu_custom_call.1} parent=5 // pred_check
        %p129 = pneg %p128
      $region14: #{tpu_custom_call.1} parent=5 // pred_check_branch
        %131 = sbr.rel (%p129) target = $region16
      $region15: #{tpu_custom_call.1} parent=5 // pred_region
        // Predicated region
        $region17: #{tpu_custom_call.1} parent=15 // pred_check
          %p132 = pneg %p51
        $region18: #{tpu_custom_call.1} parent=15 // pred_check_branch
          %134 = sbr.rel (%p132) target = $region20
        $region19: #{tpu_custom_call.1} parent=15 // pred_region
          %s135 = sand.u32 %s41, 1
          %s136 = scalar_lea.sflag [#allocation4], %s135
          %s137 = sand.u32 %s41, 1
          %s138 = smul.addr %s137, 8
          %s139 = scalar_lea.vmem [#allocation3], %s138
          %s141 = ssub.s32 128, 128
          %142 = vsyncadd %s136, %s141
          %s143 = smul.addr %s24, 4
          %s144 = sadd.s32 %s25, %s143
          %s145 = smul.addr %s144, 32
          %s146 = scalar_lea.hbm %s0, %s145
          %s147 = sshll.u32 %s139, 4
          %s148 = int_to_ptr.vmem [resolvable:$true] %s147
          %153 = dma.hbm_to_vmem [thread:$0]  %s146, 128, %s148, %s136, 32, 32, 2
        $region20: #{tpu_custom_call.1} parent=15 // pred_fallthru
          _
        // Predicated region
        $region21: #{tpu_custom_call.1} parent=15 // pred_check
          %p154 = pneg %p79
        $region22: #{tpu_custom_call.1} parent=15 // pred_check_branch
          %156 = sbr.rel (%p154) target = $region24
        $region23: #{tpu_custom_call.1} parent=15 // pred_region
          %s157 = sand.u32 %s69, 1
          %s158 = scalar_lea.sflag [#allocation7], %s157
          %s159 = sand.u32 %s69, 1
          %s160 = smul.addr %s159, 2
          %s161 = scalar_lea.vmem [#allocation6], %s160
          %s163 = ssub.s32 32, 32
          %164 = vsyncadd %s158, %s163
          %s165 = sadd.s32 %s25, %s24
          %s166 = smul.addr %s165, 32
          %s167 = scalar_lea.hbm %s1, %s166
          %s169 = sshll.u32 %s161, 4
          %s170 = int_to_ptr.vmem [resolvable:$true] %s169
          %172 = dma.hbm_to_vmem [thread:$0]  %s167, 32, %s170, %s158
        $region24: #{tpu_custom_call.1} parent=15 // pred_fallthru
          _
      $region16: #{tpu_custom_call.1} parent=5 // pred_fallthru
        _
      %p173 = scmp.le.s32.totalorder 1, %s17
      %p174 = scmp.lt.s32.totalorder %s17, 3
      %p175 = pnand %p173, %p174
      %p176 = pneg %p175
      // Predicated region
      $region25: #{tpu_custom_call.1} parent=5 // pred_check
        _
      $region26: #{tpu_custom_call.1} parent=5 // pred_check_branch
        %178 = sbr.rel (%p175) target = $region28
      $region27: #{tpu_custom_call.1} parent=5 // pred_region
        %s179 = ssub.s32 %s17, 1
        %s180 = sand.u32 %s44, 1
        %s181 = scalar_lea.sflag [#allocation4], %s180
        %s182 = sand.u32 %s44, 1
        %s183 = smul.addr %s182, 8
        %s184 = scalar_lea.vmem [#allocation3], %s183
        // Predicated region
        $region29: #{tpu_custom_call.1} parent=27 // pred_check
          %p185 = pneg %p57
        $region30: #{tpu_custom_call.1} parent=27 // pred_check_branch
          %187 = sbr.rel (%p185) target = $region32
        $region31: #{tpu_custom_call.1} parent=27 // pred_region
          %188 = dma.done %s181, 128
        $region32: #{tpu_custom_call.1} parent=27 // pred_fallthru
          _
        %s189 = sand.u32 %s72, 1
        %s190 = scalar_lea.sflag [#allocation7], %s189
        %s191 = sand.u32 %s72, 1
        %s192 = smul.addr %s191, 2
        %s193 = scalar_lea.vmem [#allocation6], %s192
        // Predicated region
        $region33: #{tpu_custom_call.1} parent=27 // pred_check
          %p194 = pneg %p85
        $region34: #{tpu_custom_call.1} parent=27 // pred_check_branch
          %196 = sbr.rel (%p194) target = $region36
        $region35: #{tpu_custom_call.1} parent=27 // pred_region
          %197 = dma.done %s190, 32
        $region36: #{tpu_custom_call.1} parent=27 // pred_fallthru
          _
        %s198 = sand.u32 %s44, 1
        %s199 = scalar_lea.sflag [#allocation4], %s198
        %s200 = sand.u32 %s44, 1
        %s201 = smul.addr %s200, 8
        %s202 = scalar_lea.vmem [#allocation3], %s201
        %p203 = pneg %p57
        %p204 = pneg %p54
        %s205 = sand.u32 %s72, 1
        %s206 = scalar_lea.sflag [#allocation7], %s205
        %s207 = sand.u32 %s72, 1
        %s208 = smul.addr %s207, 2
        %s209 = scalar_lea.vmem [#allocation6], %s208
        %p210 = pneg %p85
        %p211 = pneg %p82
        %p212 = pneg %p113
        %p213 = pneg %p110
        %s214 = sand.u32 %s100, 1
        %s215 = scalar_lea.sflag [#allocation5], %s214
        %s216 = sand.u32 %s100, 1
        %s217 = smul.addr %s216, 8
        %s218 = scalar_lea.vmem [#allocation8], %s217
        %v219 = vld [vmem:[%s193] sm:$0x3]
        %v220 = vld [vmem:[%s184] sm:$0x3]
        %s221 = scalar_lea.vmem %s184, 2 [#allocation3]
        %v222 = vld [vmem:[%s221] sm:$0x3]
        %v223 = vmax.f32 %v220, %v222
        %s224 = scalar_lea.vmem %s184, 4 [#allocation3]
        %v225 = vld [vmem:[%s224] sm:$0x3]
        %v226 = vmax.f32 %v223, %v225
        %s227 = scalar_lea.vmem %s184, 6 [#allocation3]
        %v228 = vld [vmem:[%s227] sm:$0x3]
        %v229 = vmax.f32 %v226, %v228
        %v230 = vsub.f32 %v220, %v229
        %v231 = vmul.f32 %v230, 1.442695
        %v232 = vpow.pop %v231
        %233 = vst [vmem:[#allocation2] sm:$0x3] %v232
        %v234 = vld [vmem:[%s221] sm:$0x3]
        %v235 = vsub.f32 %v234, %v229
        %v236 = vmul.f32 %v235, 1.442695
        %v237 = vpow.pop %v236
        %s238 = scalar_lea.vmem [#allocation2], 2
        %239 = vst [vmem:[%s238] sm:$0x3] %v237
        %v240 = vadd.f32 %v232, %v237
        %v241 = vld [vmem:[%s224] sm:$0x3]
        %v242 = vsub.f32 %v241, %v229
        %v243 = vmul.f32 %v242, 1.442695
        %v244 = vpow.pop %v243
        %s245 = scalar_lea.vmem [#allocation2], 4
        %246 = vst [vmem:[%s245] sm:$0x3] %v244
        %v247 = vadd.f32 %v240, %v244
        %v248 = vld [vmem:[%s227] sm:$0x3]
        %v249 = vsub.f32 %v248, %v229
        %v250 = vmul.f32 %v249, 1.442695
        %v251 = vpow.pop %v250
        %s252 = scalar_lea.vmem [#allocation2], 6
        %253 = vst [vmem:[%s252] sm:$0x3] %v251
        %v254 = vadd.f32 %v247, %v251
        %v255 = vrcp.pop %v254
        %v256 = vlaneseq
        %v257 = vshrl.u32 %v256, 7
        %v258 = vlaneseq
        %v259 = vand.u32 %v258, 127
        %v260 = vld [vmem:[#allocation2] sm:$0x3]
        %v261 = vmul.f32 %v260, %v255
        %vm262 = vcmp.eq.s32.totalorder %v219, 0
        %v263 = vsel %vm262, 1, 0
        %v264 = vcvt.s32.f32 %v263
        %v265 = vmul.f32 %v261, %v264
        %vm266 = vcmask 1041408
        %v267 = vsel %vm266, %v265, 0.0
        %v268 = vrot.slane %v267, 4
        %v269 = vadd.f32 %v267, %v268
        %v270 = vrot.slane %v269, 2
        %v271 = vadd.f32 %v269, %v270
        %v272 = vrot.slane %v271, 1
        %v273 = vadd.f32 %v271, %v272
        %274 = vadd.xlane.f32.xlu0 %v273
        %v275 = vpop.xlane.xlu0 %274
        %v276 = vsel %vm266, %v261, 0.0
        %v277 = vrot.slane %v276, 4
        %v278 = vadd.f32 %v276, %v277
        %v279 = vrot.slane %v278, 2
        %v280 = vadd.f32 %v278, %v279
        %v281 = vrot.slane %v280, 1
        %v282 = vadd.f32 %v280, %v281
        %283 = vadd.xlane.f32.xlu0 %v282
        %v284 = vpop.xlane.xlu0 %283
        %v285 = vsel %vm266, %v264, 0.0
        %v286 = vrot.slane %v285, 4
        %v287 = vadd.f32 %v285, %v286
        %v288 = vrot.slane %v287, 2
        %v289 = vadd.f32 %v287, %v288
        %v290 = vrot.slane %v289, 1
        %v291 = vadd.f32 %v289, %v290
        %292 = vadd.xlane.f32.xlu0 %v291
        %v293 = vpop.xlane.xlu0 %292
        %v294 = vadd.f32 %v284, %v293
        %vm295 = vcmp.eq.s32.totalorder %v257, 0
        %vm296 = vcmp.eq.s32.totalorder %v259, 0
        %vm297 = vmand %vm295, %vm296
        %v298 = vsel %vm297, %v275, 0.0
        %vm299 = vcmp.eq.s32.totalorder %v257, 1
        %vm300 = vmand %vm299, %vm296
        %v301 = vsel %vm300, %v294, %v298
        %v302 = vld [vmem:[%s238] sm:$0x3]
        %v303 = vmul.f32 %v302, %v255
        %vm304 = vcmp.eq.s32.totalorder %v219, 1
        %v305 = vsel %vm304, 1, 0
        %v306 = vcvt.s32.f32 %v305
        %v307 = vmul.f32 %v303, %v306
        %v308 = vsel %vm266, %v307, 0.0
        %v309 = vrot.slane %v308, 4
        %v310 = vadd.f32 %v308, %v309
        %v311 = vrot.slane %v310, 2
        %v312 = vadd.f32 %v310, %v311
        %v313 = vrot.slane %v312, 1
        %v314 = vadd.f32 %v312, %v313
        %315 = vadd.xlane.f32.xlu0 %v314
        %v316 = vpop.xlane.xlu0 %315
        %v317 = vsel %vm266, %v303, 0.0
        %v318 = vrot.slane %v317, 4
        %v319 = vadd.f32 %v317, %v318
        %v320 = vrot.slane %v319, 2
        %v321 = vadd.f32 %v319, %v320
        %v322 = vrot.slane %v321, 1
        %v323 = vadd.f32 %v321, %v322
        %324 = vadd.xlane.f32.xlu0 %v323
        %v325 = vpop.xlane.xlu0 %324
        %v326 = vsel %vm266, %v306, 0.0
        %v327 = vrot.slane %v326, 4
        %v328 = vadd.f32 %v326, %v327
        %v329 = vrot.slane %v328, 2
        %v330 = vadd.f32 %v328, %v329
        %v331 = vrot.slane %v330, 1
        %v332 = vadd.f32 %v330, %v331
        %333 = vadd.xlane.f32.xlu0 %v332
        %v334 = vpop.xlane.xlu0 %333
        %v335 = vadd.f32 %v325, %v334
        %vm336 = vcmp.eq.s32.totalorder %v259, 1
        %vm337 = vmand %vm295, %vm336
        %v338 = vsel %vm337, %v316, %v301
        %vm339 = vmand %vm299, %vm336
        %v340 = vsel %vm339, %v335, %v338
        %v341 = vld [vmem:[%s245] sm:$0x3]
        %v342 = vmul.f32 %v341, %v255
        %vm343 = vcmp.eq.s32.totalorder %v219, 2
        %v344 = vsel %vm343, 1, 0
        %v345 = vcvt.s32.f32 %v344
        %v346 = vmul.f32 %v342, %v345
        %v347 = vsel %vm266, %v346, 0.0
        %v348 = vrot.slane %v347, 4
        %v349 = vadd.f32 %v347, %v348
        %v350 = vrot.slane %v349, 2
        %v351 = vadd.f32 %v349, %v350
        %v352 = vrot.slane %v351, 1
        %v353 = vadd.f32 %v351, %v352
        %354 = vadd.xlane.f32.xlu0 %v353
        %v355 = vpop.xlane.xlu0 %354
        %v356 = vsel %vm266, %v342, 0.0
        %v357 = vrot.slane %v356, 4
        %v358 = vadd.f32 %v356, %v357
        %v359 = vrot.slane %v358, 2
        %v360 = vadd.f32 %v358, %v359
        %v361 = vrot.slane %v360, 1
        %v362 = vadd.f32 %v360, %v361
        %363 = vadd.xlane.f32.xlu0 %v362
        %v364 = vpop.xlane.xlu0 %363
        %v365 = vsel %vm266, %v345, 0.0
        %v366 = vrot.slane %v365, 4
        %v367 = vadd.f32 %v365, %v366
        %v368 = vrot.slane %v367, 2
        %v369 = vadd.f32 %v367, %v368
        %v370 = vrot.slane %v369, 1
        %v371 = vadd.f32 %v369, %v370
        %372 = vadd.xlane.f32.xlu0 %v371
        %v373 = vpop.xlane.xlu0 %372
        %v374 = vadd.f32 %v364, %v373
        %vm375 = vcmp.eq.s32.totalorder %v259, 2
        %vm376 = vmand %vm295, %vm375
        %v377 = vsel %vm376, %v355, %v340
        %vm378 = vmand %vm299, %vm375
        %v379 = vsel %vm378, %v374, %v377
        %v380 = vld [vmem:[%s252] sm:$0x3]
        %v381 = vmul.f32 %v380, %v255
        %vm382 = vcmp.eq.s32.totalorder %v219, 3
        %v383 = vsel %vm382, 1, 0
        %v384 = vcvt.s32.f32 %v383
        %v385 = vmul.f32 %v381, %v384
        %v386 = vsel %vm266, %v385, 0.0
        %v387 = vrot.slane %v386, 4
        %v388 = vadd.f32 %v386, %v387
        %v389 = vrot.slane %v388, 2
        %v390 = vadd.f32 %v388, %v389
        %v391 = vrot.slane %v390, 1
        %v392 = vadd.f32 %v390, %v391
        %393 = vadd.xlane.f32.xlu0 %v392
        %v394 = vpop.xlane.xlu0 %393
        %v395 = vsel %vm266, %v381, 0.0
        %v396 = vrot.slane %v395, 4
        %v397 = vadd.f32 %v395, %v396
        %v398 = vrot.slane %v397, 2
        %v399 = vadd.f32 %v397, %v398
        %v400 = vrot.slane %v399, 1
        %v401 = vadd.f32 %v399, %v400
        %402 = vadd.xlane.f32.xlu0 %v401
        %v403 = vpop.xlane.xlu0 %402
        %v404 = vsel %vm266, %v384, 0.0
        %v405 = vrot.slane %v404, 4
        %v406 = vadd.f32 %v404, %v405
        %v407 = vrot.slane %v406, 2
        %v408 = vadd.f32 %v406, %v407
        %v409 = vrot.slane %v408, 1
        %v410 = vadd.f32 %v408, %v409
        %411 = vadd.xlane.f32.xlu0 %v410
        %v412 = vpop.xlane.xlu0 %411
        %v413 = vadd.f32 %v403, %v412
        %vm414 = vcmp.eq.s32.totalorder %v259, 3
        %vm415 = vmand %vm295, %vm414
        %v416 = vsel %vm415, %v394, %v379
        %vm417 = vmand %vm299, %vm414
        %v418 = vsel %vm417, %v413, %v416
        %419 = vst [vmem:[%s218] sm:$0xff] %v418
        %s420 = sand.u32 %s100, 1
        %s421 = scalar_lea.sflag [#allocation5], %s420
        %s422 = sand.u32 %s100, 1
        %s423 = smul.addr %s422, 8
        %s424 = scalar_lea.vmem [#allocation8], %s423
        // Predicated region
        $region37: #{tpu_custom_call.1} parent=27 // pred_check
          %p425 = pneg %p110
        $region38: #{tpu_custom_call.1} parent=27 // pred_check_branch
          %427 = sbr.rel (%p425) target = $region40
        $region39: #{tpu_custom_call.1} parent=27 // pred_region
          %s429 = ssub.s32 128, 128
          %430 = vsyncadd %s421, %s429
          %s431 = sadd.s32 %s27, %s26
          %s432 = smul.addr %s431, 128
          %s433 = scalar_lea.hbm %s2, %s432
          %s435 = sshll.u32 %s424, 4
          %s436 = int_to_ptr.vmem [resolvable:$true] %s435
          %438 = dma.vmem_to_hbm [thread:$0]  %s436, 128, %s433, %s421
        $region40: #{tpu_custom_call.1} parent=27 // pred_fallthru
          _
      $region28: #{tpu_custom_call.1} parent=5 // pred_fallthru
        _
      %p439 = scmp.le.s32.totalorder 2, %s17
      // Predicated region
      $region41: #{tpu_custom_call.1} parent=5 // pred_check
        %p440 = pneg %p439
      $region42: #{tpu_custom_call.1} parent=5 // pred_check_branch
        %442 = sbr.rel (%p440) target = $region44
      $region43: #{tpu_custom_call.1} parent=5 // pred_region
        %s443 = ssub.s32 %s17, 2
        // Predicated region
        $region45: #{tpu_custom_call.1} parent=43 // pred_check
          %p444 = pneg %p116
        $region46: #{tpu_custom_call.1} parent=43 // pred_check_branch
          %446 = sbr.rel (%p444) target = $region48
        $region47: #{tpu_custom_call.1} parent=43 // pred_region
          %s447 = sand.u32 %s101, 1
          %s448 = scalar_lea.sflag [#allocation5], %s447
          %s449 = sand.u32 %s101, 1
          %s450 = smul.addr %s449, 8
          %s451 = scalar_lea.vmem [#allocation8], %s450
          %452 = dma.done %s448, 128
        $region48: #{tpu_custom_call.1} parent=43 // pred_fallthru
          _
      $region44: #{tpu_custom_call.1} parent=5 // pred_fallthru
        _
    $region6: #{tpu_custom_call.1} parent=1 // loop_footer
      %s21 = sadd.s32 1, %s17
    $region7: #{tpu_custom_call.1} parent=1 // loop_footer_branch
      %16 = sbr.rel target = $region3
    $region8: #{tpu_custom_call.1} parent=1 // loop_exit
      _
    %453 = vsyncpa [#allocation4], 1
    %s454 = scalar_lea.sflag [#allocation4], 1
    %455 = vsyncpa %s454, 1
    %456 = vsyncpa [#allocation7], 1
    %s457 = scalar_lea.sflag [#allocation7], 1
    %458 = vsyncpa %s457, 1
    %459 = vsyncpa [#allocation5], 1
    %s460 = scalar_lea.sflag [#allocation5], 1
    %461 = vsyncpa %s460, 1

</llo_original>
